<compile_context>
chip_gen: v6e
topology: v6e:2x2x1
jax: 0.10.0
libtpu: 0.0.40
codegen_flags: <defaults>
</compile_context>

<pallas_src>
import math
import functools

import jax
import jax.numpy as jnp
from jax import lax
from jax.experimental import pallas as pl
from jax.experimental.pallas import tpu as pltpu


def _mha_kernel(q_ref, k_ref, wq_ref, bq_ref, wk_ref, bk_ref, o_ref,
                *, num_heads: int, depth: int):
    """One grid step handles TB batch elements and writes the final
    (TB, H, Sq, Sk) layout directly (no wrapper transpose pass).

    q_ref : (TB, Sq, D_in)    VMEM, compute dtype (f32 or bf16)
    k_ref : (TB, Sk, D_in)    VMEM, compute dtype
    wq_ref: (D_in, D_out)     VMEM, compute dtype
    bq_ref: (1, D_out)        VMEM, f32
    wk_ref: (D_in, D_out)     VMEM, compute dtype
    bk_ref: (1, D_out)        VMEM, f32
    o_ref : (TB, H, Sq, Sk)   VMEM, f32  -- final layout, stored directly
    """
    TB, Sq, Din = q_ref.shape
    _, Sk, _ = k_ref.shape
    Dout = wq_ref.shape[1]
    compute_dtype = q_ref.dtype

    # Flatten batch x seq so the projection matmuls feed TB*S rows to the MXU.
    q = q_ref[...].reshape(TB * Sq, Din)
    k = k_ref[...].reshape(TB * Sk, Din)

    qp = jnp.dot(q, wq_ref[...], preferred_element_type=jnp.float32) + bq_ref[...]
    kp = jnp.dot(k, wk_ref[...], preferred_element_type=jnp.float32) + bk_ref[...]

    # Apply the 1/sqrt(depth) scale once to qp (cheaper than per score tile);
    # algebraically identical to scaling the scores (bias included).
    qp = qp * (1.0 / math.sqrt(depth))

    qp3 = qp.reshape(TB, Sq, Dout).astype(compute_dtype)
    kp3 = kp.reshape(TB, Sk, Dout).astype(compute_dtype)

    # Per-head score matmul: contract depth, batch over TB (no explicit k^T,
    # so no XLU transpose).  num_heads is small and static, so this is an
    # unrolled loop of full (TB, Sq, Sk) tile stores into the final layout.
    dn = (((2,), (2,)), ((0,), (0,)))
    for h in range(num_heads):
        qh = qp3[:, :, h * depth:(h + 1) * depth]   # (TB, Sq, depth)
        kh = kp3[:, :, h * depth:(h + 1) * depth]   # (TB, Sk, depth)
        s = lax.dot_general(qh, kh, dn, preferred_element_type=jnp.float32)
        o_ref[:, h, :, :] = s.astype(o_ref.dtype)   # full tile, static head idx


def _pick_tb(B: int, Sq: int, Sk: int, Din: int, H: int,
             in_itemsize: int, budget_bytes: int, target_rows: int = 256) -> int:
    """Batch elements per grid step.

    Pick the largest divisor of B whose double-buffered per-step block
    footprint fits the VMEM budget, stopping once TB*Sq reaches the MXU row
    target.  On single-TC chips the grid is a serial loop, so there is no
    forced >=2-block split; two parallel blocks are kept only when half the
    batch still fills the MXU rows (v7x dual TensorCore)."""
    def footprint(tb):
        q_blk = tb * Sq * Din * in_itemsize
        k_blk = tb * Sk * Din * in_itemsize
        o_blk = tb * H * Sq * Sk * 4
        return 2 * (q_blk + k_blk + o_blk)          # double-buffered blocks

    best = 1
    for tb in range(1, B + 1):
        if B % tb != 0:
            continue
        if footprint(tb) > budget_bytes:
            continue
        best = tb
        if tb * Sq >= target_rows:
            break
    # Keep two parallel blocks only if each still fills the MXU row target.
    if best == B and B % 2 == 0 and (B // 2) * Sq >= target_rows:
        best = B // 2
    return best


def multi_head_attention(k, q, wq, bq, wk, bk, *, num_heads: int,
                         compute_dtype=jnp.bfloat16):
    """k: (B, Sk, D_in), q: (B, Sq, D_in), wq/wk: (D_in, D_out), bq/bk: (D_out,)

    Returns attention scores of shape (B, num_heads, Sq, Sk), float32.
    """
    B, Sq, Din = q.shape
    _, Sk, _ = k.shape
    Dout = wq.shape[1]
    depth = Dout // num_heads

    # Cast streamed operands at the call boundary (halves DMA bytes + VMEM on
    # the bf16 path); biases stay f32 and are added to the f32 accumulator.
    q_c = q.astype(compute_dtype)
    k_c = k.astype(compute_dtype)
    wq_c = wq.astype(compute_dtype)
    wk_c = wk.astype(compute_dtype)
    bq2 = bq.reshape(1, Dout).astype(jnp.float32)
    bk2 = bk.reshape(1, Dout).astype(jnp.float32)

    in_itemsize = jnp.dtype(compute_dtype).itemsize
    vmem_budget = 48 * 1024 * 1024          # safe across v5e/v6e/v7x (64 MiB phys)
    TB = _pick_tb(B, Sq, Sk, Din, num_heads, in_itemsize, vmem_budget)

    # Derive the VMEM limit from the actual per-step footprint.
    blk_bytes = 2 * (TB * Sq * Din * in_itemsize
                     + TB * Sk * Din * in_itemsize
                     + TB * num_heads * Sq * Sk * 4)
    w_bytes = 2 * 2 * (Din * Dout * in_itemsize + Dout * 4)
    tmp_bytes = (TB * Sq * Dout + TB * Sk * Dout + TB * Sq * Sk) * 4 * 4
    vmem_limit = int(min(max(blk_bytes + w_bytes + tmp_bytes + (4 << 20),
                             32 << 20), 64 << 20))

    kernel = functools.partial(_mha_kernel, num_heads=num_heads, depth=depth)

    return pl.pallas_call(
        kernel,
        out_shape=jax.ShapeDtypeStruct((B, num_heads, Sq, Sk), jnp.float32),
        grid_spec=pltpu.PrefetchScalarGridSpec(
            num_scalar_prefetch=0,
            grid=(B // TB,),
            in_specs=[
                pl.BlockSpec((TB, Sq, Din), lambda b: (b, 0, 0)),
                pl.BlockSpec((TB, Sk, Din), lambda b: (b, 0, 0)),
                pl.BlockSpec((Din, Dout), lambda b: (0, 0)),
                pl.BlockSpec((1, Dout), lambda b: (0, 0)),
                pl.BlockSpec((Din, Dout), lambda b: (0, 0)),
                pl.BlockSpec((1, Dout), lambda b: (0, 0)),
            ],
            out_specs=pl.BlockSpec((TB, num_heads, Sq, Sk),
                                   lambda b: (b, 0, 0, 0)),
        ),
        compiler_params=pltpu.CompilerParams(
            dimension_semantics=("parallel",),
            vmem_limit_bytes=vmem_limit),
    )(q_c, k_c, wq_c, bq2, wk_c, bk2)


def _reference(k, q, wq, bq, wk, bk, num_heads):
    """Pure-JAX reference mirroring the PyTorch forward."""
    B, Sq, _ = q.shape
    Dout = wq.shape[1]
    depth = Dout // num_heads
    qp = q @ wq + bq
    kp = k @ wk + bk
    qh = qp.reshape(B, -1, num_heads, depth).transpose(0, 2, 1, 3)
    kh = kp.reshape(B, -1, num_heads, depth).transpose(0, 2, 1, 3)
    s = jnp.einsum("bhqd,bhkd->bhqk", qh, kh)
    return s / jnp.sqrt(jnp.float32(depth))


if __name__ == "__main__":
    # Small shapes consistent with the module.
    B, Sq, Sk = 2, 8, 16
    input_size, output_size, num_heads = 32, 32, 4

    key = jax.random.PRNGKey(0)
    kq, kk, kwq, kbq, kwk, kbk = jax.random.split(key, 6)

    q = jax.random.normal(kq, (B, Sq, input_size), dtype=jnp.float32)
    k = jax.random.normal(kk, (B, Sk, input_size), dtype=jnp.float32)

    # Parameters (shapes from nn.Linear(input_size, output_size)), stored
    # transposed as (D_in, D_out).
    wq = jax.random.normal(kwq, (input_size, output_size), dtype=jnp.float32) * 0.05
    bq = jax.random.normal(kbq, (output_size,), dtype=jnp.float32) * 0.05
    wk = jax.random.normal(kwk, (input_size, output_size), dtype=jnp.float32) * 0.05
    bk = jax.random.normal(kbk, (output_size,), dtype=jnp.float32) * 0.05

    ref = _reference(k, q, wq, bq, wk, bk, num_heads)

    # f32 compute path: exact-semantics check against the reference.
    out_f32 = multi_head_attention(k, q, wq, bq, wk, bk, num_heads=num_heads,
                                   compute_dtype=jnp.float32)
    out_f32 = jax.block_until_ready(out_f32)
    assert out_f32.shape == (B, num_heads, Sq, Sk)
    assert jnp.allclose(out_f32, ref, atol=1e-4, rtol=1e-4)

    # bf16 MXU path (default): looser tolerance appropriate for bf16 operands
    # with f32 accumulation.
    out_bf16 = multi_head_attention(k, q, wq, bq, wk, bk, num_heads=num_heads)
    out_bf16 = jax.block_until_ready(out_bf16)
    assert out_bf16.shape == (B, num_heads, Sq, Sk)
    assert jnp.allclose(out_bf16, ref, atol=3e-2, rtol=3e-2)

    print("KERNEL_OK")
</pallas_src>

<mosaic_0001>
module attributes {stable_mosaic.version = 11 : i64} {
  func.func @_mha_kernel(%arg0: i32, %arg1: memref<2x8x32xf32, #tpu.memory_space<vmem>>, %arg2: memref<2x16x32xf32, #tpu.memory_space<vmem>>, %arg3: memref<32x32xf32, #tpu.memory_space<vmem>>, %arg4: memref<1x32xf32, #tpu.memory_space<vmem>>, %arg5: memref<32x32xf32, #tpu.memory_space<vmem>>, %arg6: memref<1x32xf32, #tpu.memory_space<vmem>>, %arg7: memref<2x4x8x16xf32, #tpu.memory_space<vmem>>) attributes {dimension_semantics = [#tpu.dimension_semantics<parallel>], iteration_bounds = array<i64: 1>, scalar_prefetch = 0 : i64, scratch_operands = 0 : i64, tpu.core_type = #tpu.core_type<tc>, window_params = [{transform_indices = @transform_0, window_bounds = array<i64: 2, 8, 32>}, {transform_indices = @transform_1, window_bounds = array<i64: 2, 16, 32>}, {pipeline_mode = #tpu.pipeline_mode<synchronous>, transform_indices = @transform_2, window_bounds = array<i64: 32, 32>}, {pipeline_mode = #tpu.pipeline_mode<synchronous>, transform_indices = @transform_3, window_bounds = array<i64: 1, 32>}, {pipeline_mode = #tpu.pipeline_mode<synchronous>, transform_indices = @transform_4, window_bounds = array<i64: 32, 32>}, {pipeline_mode = #tpu.pipeline_mode<synchronous>, transform_indices = @transform_5, window_bounds = array<i64: 1, 32>}, {transform_indices = @transform_6, window_bounds = array<i64: 2, 4, 8, 16>}]} {
    %c0 = arith.constant 0 : index
    %c0_0 = arith.constant 0 : index
    %c0_1 = arith.constant 0 : index
    %0 = vector.load %arg1[%c0, %c0_0, %c0_1] : memref<2x8x32xf32, #tpu.memory_space<vmem>>, vector<2x8x32xf32>
    %1 = vector.shape_cast %0 : vector<2x8x32xf32> to vector<16x32xf32>
    %c0_2 = arith.constant 0 : index
    %c0_3 = arith.constant 0 : index
    %c0_4 = arith.constant 0 : index
    %2 = vector.load %arg2[%c0_2, %c0_3, %c0_4] : memref<2x16x32xf32, #tpu.memory_space<vmem>>, vector<2x16x32xf32>
    %3 = vector.shape_cast %2 : vector<2x16x32xf32> to vector<32x32xf32>
    %c0_5 = arith.constant 0 : index
    %c0_6 = arith.constant 0 : index
    %4 = vector.load %arg3[%c0_5, %c0_6] : memref<32x32xf32, #tpu.memory_space<vmem>>, vector<32x32xf32>
    %cst = arith.constant dense<0.000000e+00> : vector<16x32xf32>
    %5 = tpu.matmul %1, %4, %cst {dimension_numbers = #tpu.dot_dimension_numbers<[1], [0], [0], [1], [0, 0, 1, 1], [], []>} : vector<16x32xf32>, vector<32x32xf32>, vector<16x32xf32> -> vector<16x32xf32>
    %c0_7 = arith.constant 0 : index
    %c0_8 = arith.constant 0 : index
    %6 = vector.load %arg4[%c0_7, %c0_8] : memref<1x32xf32, #tpu.memory_space<vmem>>, vector<1x32xf32>
    %7 = vector.broadcast %6 : vector<1x32xf32> to vector<16x32xf32>
    %8 = arith.addf %5, %7 : vector<16x32xf32>
    %c0_9 = arith.constant 0 : index
    %c0_10 = arith.constant 0 : index
    %9 = vector.load %arg5[%c0_9, %c0_10] : memref<32x32xf32, #tpu.memory_space<vmem>>, vector<32x32xf32>
    %cst_11 = arith.constant dense<0.000000e+00> : vector<32x32xf32>
    %10 = tpu.matmul %3, %9, %cst_11 {dimension_numbers = #tpu.dot_dimension_numbers<[1], [0], [0], [1], [0, 0, 1, 1], [], []>} : vector<32x32xf32>, vector<32x32xf32>, vector<32x32xf32> -> vector<32x32xf32>
    %c0_12 = arith.constant 0 : index
    %c0_13 = arith.constant 0 : index
    %11 = vector.load %arg6[%c0_12, %c0_13] : memref<1x32xf32, #tpu.memory_space<vmem>>, vector<1x32xf32>
    %12 = vector.broadcast %11 : vector<1x32xf32> to vector<32x32xf32>
    %13 = arith.addf %10, %12 : vector<32x32xf32>
    %cst_14 = arith.constant 0.353553385 : f32
    %14 = vector.broadcast %cst_14 : f32 to vector<16x32xf32>
    %15 = arith.mulf %8, %14 : vector<16x32xf32>
    %16 = vector.shape_cast %15 : vector<16x32xf32> to vector<2x8x32xf32>
    %17 = vector.shape_cast %13 : vector<32x32xf32> to vector<2x16x32xf32>
    %18 = vector.extract_strided_slice %16 {offsets = [0, 0, 0], sizes = [2, 8, 8], strides = [1, 1, 1]} : vector<2x8x32xf32> to vector<2x8x8xf32>
    %19 = vector.extract_strided_slice %17 {offsets = [0, 0, 0], sizes = [2, 16, 8], strides = [1, 1, 1]} : vector<2x16x32xf32> to vector<2x16x8xf32>
    %cst_15 = arith.constant dense<0.000000e+00> : vector<2x8x16xf32>
    %20 = tpu.matmul %18, %19, %cst_15 {dimension_numbers = #tpu.dot_dimension_numbers<[2], [2], [1], [1], [0, 0, 0, 1, 1, 1], [0], [0]>} : vector<2x8x8xf32>, vector<2x16x8xf32>, vector<2x8x16xf32> -> vector<2x8x16xf32>
    %c0_16 = arith.constant 0 : index
    %c0_17 = arith.constant 0 : index
    %c0_18 = arith.constant 0 : index
    %c0_19 = arith.constant 0 : index
    %21 = vector.load %arg7[%c0_16, %c0_17, %c0_18, %c0_19] : memref<2x4x8x16xf32, #tpu.memory_space<vmem>>, vector<2x1x8x16xf32>
    %22 = vector.shape_cast %21 : vector<2x1x8x16xf32> to vector<2x8x16xf32>
    %23 = vector.shape_cast %20 : vector<2x8x16xf32> to vector<2x1x8x16xf32>
    tpu.vector_store %arg7[%c0_16, %c0_17, %c0_18, %c0_19], %23 {strides = array<i32>} : memref<2x4x8x16xf32, #tpu.memory_space<vmem>>, vector<2x1x8x16xf32>,
    %24 = vector.extract_strided_slice %16 {offsets = [0, 0, 8], sizes = [2, 8, 8], strides = [1, 1, 1]} : vector<2x8x32xf32> to vector<2x8x8xf32>
    %25 = vector.extract_strided_slice %17 {offsets = [0, 0, 8], sizes = [2, 16, 8], strides = [1, 1, 1]} : vector<2x16x32xf32> to vector<2x16x8xf32>
    %cst_20 = arith.constant dense<0.000000e+00> : vector<2x8x16xf32>
    %26 = tpu.matmul %24, %25, %cst_20 {dimension_numbers = #tpu.dot_dimension_numbers<[2], [2], [1], [1], [0, 0, 0, 1, 1, 1], [0], [0]>} : vector<2x8x8xf32>, vector<2x16x8xf32>, vector<2x8x16xf32> -> vector<2x8x16xf32>
    %c0_21 = arith.constant 0 : index
    %c1 = arith.constant 1 : index
    %c0_22 = arith.constant 0 : index
    %c0_23 = arith.constant 0 : index
    %27 = vector.load %arg7[%c0_21, %c1, %c0_22, %c0_23] : memref<2x4x8x16xf32, #tpu.memory_space<vmem>>, vector<2x1x8x16xf32>
    %28 = vector.shape_cast %27 : vector<2x1x8x16xf32> to vector<2x8x16xf32>
    %29 = vector.shape_cast %26 : vector<2x8x16xf32> to vector<2x1x8x16xf32>
    tpu.vector_store %arg7[%c0_21, %c1, %c0_22, %c0_23], %29 {strides = array<i32>} : memref<2x4x8x16xf32, #tpu.memory_space<vmem>>, vector<2x1x8x16xf32>,
    %30 = vector.extract_strided_slice %16 {offsets = [0, 0, 16], sizes = [2, 8, 8], strides = [1, 1, 1]} : vector<2x8x32xf32> to vector<2x8x8xf32>
    %31 = vector.extract_strided_slice %17 {offsets = [0, 0, 16], sizes = [2, 16, 8], strides = [1, 1, 1]} : vector<2x16x32xf32> to vector<2x16x8xf32>
    %cst_24 = arith.constant dense<0.000000e+00> : vector<2x8x16xf32>
    %32 = tpu.matmul %30, %31, %cst_24 {dimension_numbers = #tpu.dot_dimension_numbers<[2], [2], [1], [1], [0, 0, 0, 1, 1, 1], [0], [0]>} : vector<2x8x8xf32>, vector<2x16x8xf32>, vector<2x8x16xf32> -> vector<2x8x16xf32>
    %c0_25 = arith.constant 0 : index
    %c2 = arith.constant 2 : index
    %c0_26 = arith.constant 0 : index
    %c0_27 = arith.constant 0 : index
    %33 = vector.load %arg7[%c0_25, %c2, %c0_26, %c0_27] : memref<2x4x8x16xf32, #tpu.memory_space<vmem>>, vector<2x1x8x16xf32>
    %34 = vector.shape_cast %33 : vector<2x1x8x16xf32> to vector<2x8x16xf32>
    %35 = vector.shape_cast %32 : vector<2x8x16xf32> to vector<2x1x8x16xf32>
    tpu.vector_store %arg7[%c0_25, %c2, %c0_26, %c0_27], %35 {strides = array<i32>} : memref<2x4x8x16xf32, #tpu.memory_space<vmem>>, vector<2x1x8x16xf32>,
    %36 = vector.extract_strided_slice %16 {offsets = [0, 0, 24], sizes = [2, 8, 8], strides = [1, 1, 1]} : vector<2x8x32xf32> to vector<2x8x8xf32>
    %37 = vector.extract_strided_slice %17 {offsets = [0, 0, 24], sizes = [2, 16, 8], strides = [1, 1, 1]} : vector<2x16x32xf32> to vector<2x16x8xf32>
    %cst_28 = arith.constant dense<0.000000e+00> : vector<2x8x16xf32>
    %38 = tpu.matmul %36, %37, %cst_28 {dimension_numbers = #tpu.dot_dimension_numbers<[2], [2], [1], [1], [0, 0, 0, 1, 1, 1], [0], [0]>} : vector<2x8x8xf32>, vector<2x16x8xf32>, vector<2x8x16xf32> -> vector<2x8x16xf32>
    %c0_29 = arith.constant 0 : index
    %c3 = arith.constant 3 : index
    %c0_30 = arith.constant 0 : index
    %c0_31 = arith.constant 0 : index
    %39 = vector.load %arg7[%c0_29, %c3, %c0_30, %c0_31] : memref<2x4x8x16xf32, #tpu.memory_space<vmem>>, vector<2x1x8x16xf32>
    %40 = vector.shape_cast %39 : vector<2x1x8x16xf32> to vector<2x8x16xf32>
    %41 = vector.shape_cast %38 : vector<2x8x16xf32> to vector<2x1x8x16xf32>
    tpu.vector_store %arg7[%c0_29, %c3, %c0_30, %c0_31], %41 {strides = array<i32>} : memref<2x4x8x16xf32, #tpu.memory_space<vmem>>, vector<2x1x8x16xf32>,
    return
  }
  func.func @transform_0(%arg0: i32) -> (i32, i32, i32) {
    %c0_i32 = arith.constant 0 : i32
    %c0_i32_0 = arith.constant 0 : i32
    %c0_i32_1 = arith.constant 0 : i32
    return %arg0, %c0_i32, %c0_i32_0 : i32, i32, i32
  }
  func.func @transform_1(%arg0: i32) -> (i32, i32, i32) {
    %c0_i32 = arith.constant 0 : i32
    %c0_i32_0 = arith.constant 0 : i32
    %c0_i32_1 = arith.constant 0 : i32
    return %arg0, %c0_i32, %c0_i32_0 : i32, i32, i32
  }
  func.func @transform_2(%arg0: i32) -> (i32, i32) {
    %c0_i32 = arith.constant 0 : i32
    %c0_i32_0 = arith.constant 0 : i32
    %c0_i32_1 = arith.constant 0 : i32
    return %c0_i32, %c0_i32_0 : i32, i32
  }
  func.func @transform_3(%arg0: i32) -> (i32, i32) {
    %c0_i32 = arith.constant 0 : i32
    %c0_i32_0 = arith.constant 0 : i32
    %c0_i32_1 = arith.constant 0 : i32
    return %c0_i32, %c0_i32_0 : i32, i32
  }
  func.func @transform_4(%arg0: i32) -> (i32, i32) {
    %c0_i32 = arith.constant 0 : i32
    %c0_i32_0 = arith.constant 0 : i32
    %c0_i32_1 = arith.constant 0 : i32
    return %c0_i32, %c0_i32_0 : i32, i32
  }
  func.func @transform_5(%arg0: i32) -> (i32, i32) {
    %c0_i32 = arith.constant 0 : i32
    %c0_i32_0 = arith.constant 0 : i32
    %c0_i32_1 = arith.constant 0 : i32
    return %c0_i32, %c0_i32_0 : i32, i32
  }
  func.func @transform_6(%arg0: i32) -> (i32, i32, i32, i32) {
    %c0_i32 = arith.constant 0 : i32
    %c0_i32_0 = arith.constant 0 : i32
    %c0_i32_1 = arith.constant 0 : i32
    %c0_i32_2 = arith.constant 0 : i32
    return %arg0, %c0_i32, %c0_i32_0, %c0_i32_1 : i32, i32, i32, i32
  }
}

</mosaic_0001>

<llo_original>
// kernel: tpu_custom_call.1
$region0: #{tpu_custom_call.1}
  #allocation0 [shape = 'u32[]', space=smem, size = 0x4, offset = 0x4, fixed_abs, tag = 'smem constant byte address 0x4 - core index']
  #allocation1 [shape = 'u32[144,128]{1,0:T(1,128)}', space=vmem, size = 0x12000, scoped, tag = 'internal scratch']
  %s0 = inlined_call_operand.hbm [shape: f32[2,8,32], index: 0, kind: input, shape index: {}]
  %s1 = inlined_call_operand.hbm [shape: f32[2,16,32], index: 1, kind: input, shape index: {}]
  %s2 = inlined_call_operand.hbm [shape: f32[32,32], index: 2, kind: input, shape index: {}]
  %s3 = inlined_call_operand.vmem [shape: f32[1,32], index: 3, kind: input, shape index: {}]
  %s4 = inlined_call_operand.hbm [shape: f32[32,32], index: 4, kind: input, shape index: {}]
  %s5 = inlined_call_operand.vmem [shape: f32[1,32], index: 5, kind: input, shape index: {}]
  %s6 = inlined_call_operand.hbm [shape: f32[2,4,8,16], index: 6, kind: output, shape index: {}]
  %s7 = sld [smem:[#allocation0]]
  $region50: #{tpu_custom_call.1} parent=0
    _
  %s9 = ssub.s32 1, %s7
  %s10 = scalar_select 0, %s9, %s7
  $region1: #{tpu_custom_call.1} parent=0
    #allocation2 [shape = 'u8[8192]{0}', space=vmem, size = 0x2000, scoped, tag = 'input window, operand 0, single buffered']
    #allocation3 [shape = 's32[1]{0}', space=sflag, size = 0x4, scoped, tag = 'scoped memory for tpu_custom_call.1']
    #allocation4 [shape = 's32[1]{0}', space=sflag, size = 0x4, scoped, tag = 'scoped memory for tpu_custom_call.1']
    #allocation5 [shape = 'u8[16384]{0}', space=vmem, size = 0x4000, scoped, tag = 'input window, operand 1, single buffered']
    #allocation6 [shape = 's32[1]{0}', space=sflag, size = 0x4, scoped, tag = 'scoped memory for tpu_custom_call.1']
    #allocation7 [shape = 'u8[16384]{0}', space=vmem, size = 0x4000, scoped, tag = 'input window, operand 2, single buffered']
    #allocation8 [shape = 'u8[16384]{0}', space=vmem, size = 0x4000, scoped, tag = 'input window, operand 4, single buffered']
    #allocation9 [shape = 's32[1]{0}', space=sflag, size = 0x4, scoped, tag = 'scoped memory for tpu_custom_call.1']
    #allocation10 [shape = 'u8[32768]{0}', space=vmem, size = 0x8000, scoped, tag = 'output window, operand 0, single buffered']
    %11 = vsyncpa [#allocation3], 0
    %12 = vsyncpa [#allocation6], 0
    %13 = vsyncpa [#allocation9], 0
    %14 = vsyncpa [#allocation4], 0
    // Predicated region
    $region2: #{tpu_custom_call.1} parent=1 // pred_check
      _
    $region3: #{tpu_custom_call.1} parent=1 // pred_check_branch
      %16 = sbr.rel (0) target = $region5
    $region4: #{tpu_custom_call.1} parent=1 // pred_region
      %s18 = ssub.s32 256, 256
      %19 = vsyncadd [#allocation3], %s18
      %s20 = sshll.u32 [#allocation2], 4
      %s21 = int_to_ptr.vmem [resolvable:$true] %s20
      %26 = dma.hbm_to_vmem [thread:$0]  %s0, 256, %s21, [#allocation3], 128, 128, 8
    $region5: #{tpu_custom_call.1} parent=1 // pred_fallthru
      _
    // Predicated region
    $region6: #{tpu_custom_call.1} parent=1 // pred_check
      _
    $region7: #{tpu_custom_call.1} parent=1 // pred_check_branch
      %28 = sbr.rel (0) target = $region9
    $region8: #{tpu_custom_call.1} parent=1 // pred_region
      %s30 = ssub.s32 512, 512
      %31 = vsyncadd [#allocation6], %s30
      %s32 = sshll.u32 [#allocation5], 4
      %s33 = int_to_ptr.vmem [resolvable:$true] %s32
      %38 = dma.hbm_to_vmem [thread:$0]  %s1, 512, %s33, [#allocation6], 128, 128, 8
    $region9: #{tpu_custom_call.1} parent=1 // pred_fallthru
      _
    // Predicated region
    $region10: #{tpu_custom_call.1} parent=1 // pred_check
      _
    $region11: #{tpu_custom_call.1} parent=1 // pred_check_branch
      %40 = sbr.rel (0) target = $region13
    $region12: #{tpu_custom_call.1} parent=1 // pred_region
      %s42 = ssub.s32 512, 512
      %43 = vsyncadd [#allocation6], %s42
      %s44 = sshll.u32 [#allocation7], 4
      %s45 = int_to_ptr.vmem [resolvable:$true] %s44
      %50 = dma.hbm_to_vmem [thread:$0]  %s2, 512, %s45, [#allocation6], 128, 128, 8
    $region13: #{tpu_custom_call.1} parent=1 // pred_fallthru
      _
    // Predicated region
    $region14: #{tpu_custom_call.1} parent=1 // pred_check
      _
    $region15: #{tpu_custom_call.1} parent=1 // pred_check_branch
      %52 = sbr.rel (0) target = $region17
    $region16: #{tpu_custom_call.1} parent=1 // pred_region
      _
    $region17: #{tpu_custom_call.1} parent=1 // pred_fallthru
      _
    // Predicated region
    $region18: #{tpu_custom_call.1} parent=1 // pred_check
      _
    $region19: #{tpu_custom_call.1} parent=1 // pred_check_branch
      %54 = sbr.rel (0) target = $region21
    $region20: #{tpu_custom_call.1} parent=1 // pred_region
      %s56 = ssub.s32 512, 512
      %57 = vsyncadd [#allocation9], %s56
      %s58 = sshll.u32 [#allocation8], 4
      %s59 = int_to_ptr.vmem [resolvable:$true] %s58
      %64 = dma.hbm_to_vmem [thread:$0]  %s4, 512, %s59, [#allocation9], 128, 128, 8
    $region21: #{tpu_custom_call.1} parent=1 // pred_fallthru
      _
    // Predicated region
    $region22: #{tpu_custom_call.1} parent=1 // pred_check
      _
    $region23: #{tpu_custom_call.1} parent=1 // pred_check_branch
      %66 = sbr.rel (0) target = $region25
    $region24: #{tpu_custom_call.1} parent=1 // pred_region
      _
    $region25: #{tpu_custom_call.1} parent=1 // pred_fallthru
      _
    // Predicated region
    $region26: #{tpu_custom_call.1} parent=1 // pred_check
      _
    $region27: #{tpu_custom_call.1} parent=1 // pred_check_branch
      %68 = sbr.rel (0) target = $region29
    $region28: #{tpu_custom_call.1} parent=1 // pred_region
      %69 = dma.done [#allocation3], 256
    $region29: #{tpu_custom_call.1} parent=1 // pred_fallthru
      _
    // Predicated region
    $region30: #{tpu_custom_call.1} parent=1 // pred_check
      _
    $region31: #{tpu_custom_call.1} parent=1 // pred_check_branch
      %71 = sbr.rel (0) target = $region33
    $region32: #{tpu_custom_call.1} parent=1 // pred_region
      %72 = dma.done [#allocation6], 512
    $region33: #{tpu_custom_call.1} parent=1 // pred_fallthru
      _
    // Predicated region
    $region34: #{tpu_custom_call.1} parent=1 // pred_check
      _
    $region35: #{tpu_custom_call.1} parent=1 // pred_check_branch
      %74 = sbr.rel (0) target = $region37
    $region36: #{tpu_custom_call.1} parent=1 // pred_region
      %75 = dma.done [#allocation6], 512
    $region37: #{tpu_custom_call.1} parent=1 // pred_fallthru
      _
    // Predicated region
    $region38: #{tpu_custom_call.1} parent=1 // pred_check
      _
    $region39: #{tpu_custom_call.1} parent=1 // pred_check_branch
      %77 = sbr.rel (0) target = $region41
    $region40: #{tpu_custom_call.1} parent=1 // pred_region
      %78 = dma.done [#allocation9], 512
    $region41: #{tpu_custom_call.1} parent=1 // pred_fallthru
      _
    %v79 = vld [vmem:[#allocation2] sm:$0xff]
    %v80 = vld [vmem:[#allocation2 + $0x8] sm:$0xff]
    %v81 = vld [vmem:[#allocation5] sm:$0xff]
    %v82 = vld [vmem:[#allocation5 + $0x8] sm:$0xff]
    %v83 = vld [vmem:[#allocation5 + $0x10] sm:$0xff]
    %v84 = vld [vmem:[#allocation5 + $0x18] sm:$0xff]
    %v85 = vld [vmem:[#allocation7] sm:$0xff]
    %v86 = vld [vmem:[#allocation7 + $0x8] sm:$0xff]
    %v87 = vld [vmem:[#allocation7 + $0x10] sm:$0xff]
    %v88 = vld [vmem:[#allocation7 + $0x18] sm:$0xff]
    %v89 = vld [vmem:[%s3] sm:$0x1]
    %v91 = vlaneseq
    %v92 = vshrl.u32 %v91, 7
    %v93 = vsub.s32 0, %v92
    %v94 = vrot.slane %v89, %v93
    %vm96 = vcmask 261120
    %v98 = vsel %vm96, %v79, 0
    %v101 = vsel %vm96, %v80, 0
    %103 = vmatprep.subr.mxu0 0.0
    %104 = vmatpush1.msra.mxu0 0.0
    %105 = vmatprep.subr.mxu0 0.0
    %106 = vmatpush1.msra.mxu0 0.0
    %107 = vmatprep.subr.mxu0 0.0
    %108 = vmatpush1.msra.mxu0 0.0
    %109 = vmatprep.subr.mxu0 0.0
    %110 = vmatpush1.msra.mxu0 0.0
    %111 = vmatprep.subr.mxu0 0.0
    %112 = vmatpush1.msra.mxu0 0.0
    %113 = vmatprep.subr.mxu0 0.0
    %114 = vmatpush1.msra.mxu0 0.0
    %115 = vmatprep.subr.mxu0 0.0
    %116 = vmatpush1.msra.mxu0 0.0
    %117 = vmatprep.subr.mxu0 0.0
    %118 = vmatpush1.msra.mxu0 0.0
    %119 = vmatprep.subr.mxu0 0.0
    %120 = vmatpush1.msra.mxu0 0.0
    %121 = vmatprep.subr.mxu0 0.0
    %122 = vmatpush1.msra.mxu0 0.0
    %123 = vmatprep.subr.mxu0 0.0
    %124 = vmatpush1.msra.mxu0 0.0
    %125 = vmatprep.subr.mxu0 0.0
    %126 = vmatpush1.msra.mxu0 0.0
    %127 = vmatprep.subr.mxu0 0.0
    %128 = vmatpush1.msra.mxu0 %v88
    %129 = vmatprep.subr.mxu0 0.0
    %130 = vmatpush1.msra.mxu0 %v87
    %131 = vmatprep.subr.mxu0 0.0
    %132 = vmatpush1.msra.mxu0 %v86
    %133 = vmatprep.subr.mxu0 0.0
    %134 = vmatpush1.msra.mxu0 %v85
    %135 = vmatprep.subr.mxu0 0.0
    %136 = vmatpush2.msra.mxu0 0.0
    %137 = vmatprep.subr.mxu0 0.0
    %138 = vmatpush2.msra.mxu0 0.0
    %139 = vmatprep.subr.mxu0 0.0
    %140 = vmatpush2.msra.mxu0 0.0
    %141 = vmatprep.subr.mxu0 0.0
    %142 = vmatpush2.msra.mxu0 0.0
    %143 = vmatprep.subr.mxu0 0.0
    %144 = vmatpush2.msra.mxu0 0.0
    %145 = vmatprep.subr.mxu0 0.0
    %146 = vmatpush2.msra.mxu0 0.0
    %147 = vmatprep.subr.mxu0 0.0
    %148 = vmatpush2.msra.mxu0 0.0
    %149 = vmatprep.subr.mxu0 0.0
    %150 = vmatpush2.msra.mxu0 0.0
    %151 = vmatprep.subr.mxu0 0.0
    %152 = vmatpush2.msra.mxu0 0.0
    %153 = vmatprep.subr.mxu0 0.0
    %154 = vmatpush2.msra.mxu0 0.0
    %155 = vmatprep.subr.mxu0 0.0
    %156 = vmatpush2.msra.mxu0 0.0
    %157 = vmatprep.subr.mxu0 0.0
    %158 = vmatpush2.msra.mxu0 0.0
    %159 = vmatprep.subr.mxu0 0.0
    %160 = vmatpush2.msra.mxu0 0.0
    %161 = vmatprep.subr.mxu0 0.0
    %162 = vmatpush2.msra.mxu0 0.0
    %163 = vmatprep.subr.mxu0 0.0
    %164 = vmatpush2.msra.mxu0 0.0
    %165 = vmatprep.subr.mxu0 0.0
    %166 = vmatpush2.msra.mxu0 0.0
    %167 = vmatprep.mubr.f32.mxu0 0.0
    %168 = vmatmul.mubr.f32.gmra.mxu0 %v98
    %v169 = vpop.f32.mrf.mxu0
    %v170 = vadd.f32 %v94, %v169
    %v171 = vpop.f32.mrf.mxu0
    %172 = vmatprep.mubr.f32.mxu0 0.0
    %173 = vmatmul.mubr.f32.gmra.mxu0 %v101
    %v174 = vpop.f32.mrf.mxu0
    %v175 = vadd.f32 %v94, %v174
    %v176 = vpop.f32.mrf.mxu0
    %177 = vdwg.mxu0
    %v178 = vld [vmem:[#allocation8] sm:$0xff]
    %v179 = vld [vmem:[#allocation8 + $0x8] sm:$0xff]
    %v180 = vld [vmem:[#allocation8 + $0x10] sm:$0xff]
    %v181 = vld [vmem:[#allocation8 + $0x18] sm:$0xff]
    %v182 = vld [vmem:[%s5] sm:$0x1]
    %v184 = vlaneseq
    %v185 = vshrl.u32 %v184, 7
    %v186 = vsub.s32 0, %v185
    %v187 = vrot.slane %v182, %v186
    %v190 = vsel %vm96, %v81, 0
    %v193 = vsel %vm96, %v82, 0
    %v196 = vsel %vm96, %v83, 0
    %v199 = vsel %vm96, %v84, 0
    %201 = vmatprep.subr.mxu0 0.0
    %202 = vmatpush1.msra.mxu0 0.0
    %203 = vmatprep.subr.mxu0 0.0
    %204 = vmatpush1.msra.mxu0 0.0
    %205 = vmatprep.subr.mxu0 0.0
    %206 = vmatpush1.msra.mxu0 0.0
    %207 = vmatprep.subr.mxu0 0.0
    %208 = vmatpush1.msra.mxu0 0.0
    %209 = vmatprep.subr.mxu0 0.0
    %210 = vmatpush1.msra.mxu0 0.0
    %211 = vmatprep.subr.mxu0 0.0
    %212 = vmatpush1.msra.mxu0 0.0
    %213 = vmatprep.subr.mxu0 0.0
    %214 = vmatpush1.msra.mxu0 0.0
    %215 = vmatprep.subr.mxu0 0.0
    %216 = vmatpush1.msra.mxu0 0.0
    %217 = vmatprep.subr.mxu0 0.0
    %218 = vmatpush1.msra.mxu0 0.0
    %219 = vmatprep.subr.mxu0 0.0
    %220 = vmatpush1.msra.mxu0 0.0
    %221 = vmatprep.subr.mxu0 0.0
    %222 = vmatpush1.msra.mxu0 0.0
    %223 = vmatprep.subr.mxu0 0.0
    %224 = vmatpush1.msra.mxu0 0.0
    %225 = vmatprep.subr.mxu0 0.0
    %226 = vmatpush1.msra.mxu0 %v181
    %227 = vmatprep.subr.mxu0 0.0
    %228 = vmatpush1.msra.mxu0 %v180
    %229 = vmatprep.subr.mxu0 0.0
    %230 = vmatpush1.msra.mxu0 %v179
    %231 = vmatprep.subr.mxu0 0.0
    %232 = vmatpush1.msra.mxu0 %v178
    %233 = vmatprep.subr.mxu0 0.0
    %234 = vmatpush2.msra.mxu0 0.0
    %235 = vmatprep.subr.mxu0 0.0
    %236 = vmatpush2.msra.mxu0 0.0
    %237 = vmatprep.subr.mxu0 0.0
    %238 = vmatpush2.msra.mxu0 0.0
    %239 = vmatprep.subr.mxu0 0.0
    %240 = vmatpush2.msra.mxu0 0.0
    %241 = vmatprep.subr.mxu0 0.0
    %242 = vmatpush2.msra.mxu0 0.0
    %243 = vmatprep.subr.mxu0 0.0
    %244 = vmatpush2.msra.mxu0 0.0
    %245 = vmatprep.subr.mxu0 0.0
    %246 = vmatpush2.msra.mxu0 0.0
    %247 = vmatprep.subr.mxu0 0.0
    %248 = vmatpush2.msra.mxu0 0.0
    %249 = vmatprep.subr.mxu0 0.0
    %250 = vmatpush2.msra.mxu0 0.0
    %251 = vmatprep.subr.mxu0 0.0
    %252 = vmatpush2.msra.mxu0 0.0
    %253 = vmatprep.subr.mxu0 0.0
    %254 = vmatpush2.msra.mxu0 0.0
    %255 = vmatprep.subr.mxu0 0.0
    %256 = vmatpush2.msra.mxu0 0.0
    %257 = vmatprep.subr.mxu0 0.0
    %258 = vmatpush2.msra.mxu0 0.0
    %259 = vmatprep.subr.mxu0 0.0
    %260 = vmatpush2.msra.mxu0 0.0
    %261 = vmatprep.subr.mxu0 0.0
    %262 = vmatpush2.msra.mxu0 0.0
    %263 = vmatprep.subr.mxu0 0.0
    %264 = vmatpush2.msra.mxu0 0.0
    %265 = vmatprep.mubr.f32.mxu0 0.0
    %266 = vmatmul.mubr.f32.gmra.mxu0 %v190
    %v267 = vpop.f32.mrf.mxu0
    %v268 = vadd.f32 %v187, %v267
    %v269 = vpop.f32.mrf.mxu0
    %270 = vmatprep.mubr.f32.mxu0 0.0
    %271 = vmatmul.mubr.f32.gmra.mxu0 %v193
    %v272 = vpop.f32.mrf.mxu0
    %v273 = vadd.f32 %v187, %v272
    %v274 = vpop.f32.mrf.mxu0
    %275 = vmatprep.mubr.f32.mxu0 0.0
    %276 = vmatmul.mubr.f32.gmra.mxu0 %v196
    %v277 = vpop.f32.mrf.mxu0
    %v278 = vadd.f32 %v187, %v277
    %v279 = vpop.f32.mrf.mxu0
    %280 = vmatprep.mubr.f32.mxu0 0.0
    %281 = vmatmul.mubr.f32.gmra.mxu0 %v199
    %v282 = vpop.f32.mrf.mxu0
    %v283 = vadd.f32 %v187, %v282
    %v284 = vpop.f32.mrf.mxu0
    %285 = vdwg.mxu0
    %v286 = vmul.f32 %v170, 0.35355338
    %v287 = vmul.f32 %v175, 0.35355338
    %vm288 = vcmask 64512
    %v290 = vsel %vm288, %v286, 0
    %v293 = vsel %vm288, %v268, 0
    %v296 = vsel %vm288, %v273, 0
    %298 = vmatprep.subr.mxu0 0.0
    %299 = vmatpush1.xpose.msra.mxu0 0.0
    %300 = vmatprep.subr.mxu0 0.0
    %301 = vmatpush1.xpose.msra.mxu0 0.0
    %302 = vmatprep.subr.mxu0 0.0
    %303 = vmatpush1.xpose.msra.mxu0 0.0
    %304 = vmatprep.subr.mxu0 0.0
    %305 = vmatpush1.xpose.msra.mxu0 0.0
    %306 = vmatprep.subr.mxu0 0.0
    %307 = vmatpush1.xpose.msra.mxu0 0.0
    %308 = vmatprep.subr.mxu0 0.0
    %309 = vmatpush1.xpose.msra.mxu0 0.0
    %310 = vmatprep.subr.mxu0 0.0
    %311 = vmatpush1.xpose.msra.mxu0 0.0
    %312 = vmatprep.subr.mxu0 0.0
    %313 = vmatpush1.xpose.msra.mxu0 0.0
    %314 = vmatprep.subr.mxu0 0.0
    %315 = vmatpush1.xpose.msra.mxu0 0.0
    %316 = vmatprep.subr.mxu0 0.0
    %317 = vmatpush1.xpose.msra.mxu0 0.0
    %318 = vmatprep.subr.mxu0 0.0
    %319 = vmatpush1.xpose.msra.mxu0 0.0
    %320 = vmatprep.subr.mxu0 0.0
    %321 = vmatpush1.xpose.msra.mxu0 0.0
    %322 = vmatprep.subr.mxu0 0.0
    %323 = vmatpush1.xpose.msra.mxu0 0.0
    %324 = vmatprep.subr.mxu0 0.0
    %325 = vmatpush1.xpose.msra.mxu0 0.0
    %326 = vmatprep.subr.mxu0 0.0
    %327 = vmatpush1.xpose.msra.mxu0 %v296
    %328 = vmatprep.subr.mxu0 0.0
    %329 = vmatpush1.xpose.msra.mxu0 %v293
    %330 = vmatprep.subr.mxu0 0.0
    %331 = vmatpush2.xpose.msra.mxu0 0.0
    %332 = vmatprep.subr.mxu0 0.0
    %333 = vmatpush2.xpose.msra.mxu0 0.0
    %334 = vmatprep.subr.mxu0 0.0
    %335 = vmatpush2.xpose.msra.mxu0 0.0
    %336 = vmatprep.subr.mxu0 0.0
    %337 = vmatpush2.xpose.msra.mxu0 0.0
    %338 = vmatprep.subr.mxu0 0.0
    %339 = vmatpush2.xpose.msra.mxu0 0.0
    %340 = vmatprep.subr.mxu0 0.0
    %341 = vmatpush2.xpose.msra.mxu0 0.0
    %342 = vmatprep.subr.mxu0 0.0
    %343 = vmatpush2.xpose.msra.mxu0 0.0
    %344 = vmatprep.subr.mxu0 0.0
    %345 = vmatpush2.xpose.msra.mxu0 0.0
    %346 = vmatprep.subr.mxu0 0.0
    %347 = vmatpush2.xpose.msra.mxu0 0.0
    %348 = vmatprep.subr.mxu0 0.0
    %349 = vmatpush2.xpose.msra.mxu0 0.0
    %350 = vmatprep.subr.mxu0 0.0
    %351 = vmatpush2.xpose.msra.mxu0 0.0
    %352 = vmatprep.subr.mxu0 0.0
    %353 = vmatpush2.xpose.msra.mxu0 0.0
    %354 = vmatprep.subr.mxu0 0.0
    %355 = vmatpush2.xpose.msra.mxu0 0.0
    %356 = vmatprep.subr.mxu0 0.0
    %357 = vmatpush2.xpose.msra.mxu0 0.0
    %358 = vmatprep.subr.mxu0 0.0
    %359 = vmatpush2.xpose.msra.mxu0 0.0
    %360 = vmatprep.subr.mxu0 0.0
    %361 = vmatpush2.xpose.msra.mxu0 0.0
    %362 = vmatprep.mubr.f32.mxu0 0.0
    %363 = vmatmul.mubr.f32.gmra.mxu0 %v290
    %v364 = vpop.f32.mrf.mxu0
    %v365 = vadd.f32 0.0, %v364
    %v366 = vpop.f32.mrf.mxu0
    %367 = vdwg.mxu0
    %v369 = vsel %vm288, %v287, 0
    %v372 = vsel %vm288, %v278, 0
    %v375 = vsel %vm288, %v283, 0
    %377 = vmatprep.subr.mxu0 0.0
    %378 = vmatpush1.xpose.msra.mxu0 0.0
    %379 = vmatprep.subr.mxu0 0.0
    %380 = vmatpush1.xpose.msra.mxu0 0.0
    %381 = vmatprep.subr.mxu0 0.0
    %382 = vmatpush1.xpose.msra.mxu0 0.0
    %383 = vmatprep.subr.mxu0 0.0
    %384 = vmatpush1.xpose.msra.mxu0 0.0
    %385 = vmatprep.subr.mxu0 0.0
    %386 = vmatpush1.xpose.msra.mxu0 0.0
    %387 = vmatprep.subr.mxu0 0.0
    %388 = vmatpush1.xpose.msra.mxu0 0.0
    %389 = vmatprep.subr.mxu0 0.0
    %390 = vmatpush1.xpose.msra.mxu0 0.0
    %391 = vmatprep.subr.mxu0 0.0
    %392 = vmatpush1.xpose.msra.mxu0 0.0
    %393 = vmatprep.subr.mxu0 0.0
    %394 = vmatpush1.xpose.msra.mxu0 0.0
    %395 = vmatprep.subr.mxu0 0.0
    %396 = vmatpush1.xpose.msra.mxu0 0.0
    %397 = vmatprep.subr.mxu0 0.0
    %398 = vmatpush1.xpose.msra.mxu0 0.0
    %399 = vmatprep.subr.mxu0 0.0
    %400 = vmatpush1.xpose.msra.mxu0 0.0
    %401 = vmatprep.subr.mxu0 0.0
    %402 = vmatpush1.xpose.msra.mxu0 0.0
    %403 = vmatprep.subr.mxu0 0.0
    %404 = vmatpush1.xpose.msra.mxu0 0.0
    %405 = vmatprep.subr.mxu0 0.0
    %406 = vmatpush1.xpose.msra.mxu0 %v375
    %407 = vmatprep.subr.mxu0 0.0
    %408 = vmatpush1.xpose.msra.mxu0 %v372
    %409 = vmatprep.subr.mxu0 0.0
    %410 = vmatpush2.xpose.msra.mxu0 0.0
    %411 = vmatprep.subr.mxu0 0.0
    %412 = vmatpush2.xpose.msra.mxu0 0.0
    %413 = vmatprep.subr.mxu0 0.0
    %414 = vmatpush2.xpose.msra.mxu0 0.0
    %415 = vmatprep.subr.mxu0 0.0
    %416 = vmatpush2.xpose.msra.mxu0 0.0
    %417 = vmatprep.subr.mxu0 0.0
    %418 = vmatpush2.xpose.msra.mxu0 0.0
    %419 = vmatprep.subr.mxu0 0.0
    %420 = vmatpush2.xpose.msra.mxu0 0.0
    %421 = vmatprep.subr.mxu0 0.0
    %422 = vmatpush2.xpose.msra.mxu0 0.0
    %423 = vmatprep.subr.mxu0 0.0
    %424 = vmatpush2.xpose.msra.mxu0 0.0
    %425 = vmatprep.subr.mxu0 0.0
    %426 = vmatpush2.xpose.msra.mxu0 0.0
    %427 = vmatprep.subr.mxu0 0.0
    %428 = vmatpush2.xpose.msra.mxu0 0.0
    %429 = vmatprep.subr.mxu0 0.0
    %430 = vmatpush2.xpose.msra.mxu0 0.0
    %431 = vmatprep.subr.mxu0 0.0
    %432 = vmatpush2.xpose.msra.mxu0 0.0
    %433 = vmatprep.subr.mxu0 0.0
    %434 = vmatpush2.xpose.msra.mxu0 0.0
    %435 = vmatprep.subr.mxu0 0.0
    %436 = vmatpush2.xpose.msra.mxu0 0.0
    %437 = vmatprep.subr.mxu0 0.0
    %438 = vmatpush2.xpose.msra.mxu0 0.0
    %439 = vmatprep.subr.mxu0 0.0
    %440 = vmatpush2.xpose.msra.mxu0 0.0
    %441 = vmatprep.mubr.f32.mxu0 0.0
    %442 = vmatmul.mubr.f32.gmra.mxu0 %v369
    %v443 = vpop.f32.mrf.mxu0
    %v444 = vadd.f32 0.0, %v443
    %v445 = vpop.f32.mrf.mxu0
    %446 = vdwg.mxu0
    %vm447 = vcmask 130048
    %448 = vst.msk [vmem:[#allocation10] sm:$0xff] %vm447, %v365
    %449 = vst.msk [vmem:[#allocation10 + $0x20] sm:$0xff] %vm447, %v444
    %450 = vrot.lane.b32.xlu0 %v286, 120
    %v451 = vpop.permute.xlu0 %450
    %452 = vrot.lane.b32.xlu0 %v268, 120
    %v453 = vpop.permute.xlu0 %452
    %454 = vrot.lane.b32.xlu0 %v273, 120
    %v455 = vpop.permute.xlu0 %454
    %v456 = vsel %vm288, %v451, 0
    %v458 = vsel %vm288, %v453, 0
    %v460 = vsel %vm288, %v455, 0
    %462 = vmatprep.subr.mxu0 0.0
    %463 = vmatpush1.xpose.msra.mxu0 0.0
    %464 = vmatprep.subr.mxu0 0.0
    %465 = vmatpush1.xpose.msra.mxu0 0.0
    %466 = vmatprep.subr.mxu0 0.0
    %467 = vmatpush1.xpose.msra.mxu0 0.0
    %468 = vmatprep.subr.mxu0 0.0
    %469 = vmatpush1.xpose.msra.mxu0 0.0
    %470 = vmatprep.subr.mxu0 0.0
    %471 = vmatpush1.xpose.msra.mxu0 0.0
    %472 = vmatprep.subr.mxu0 0.0
    %473 = vmatpush1.xpose.msra.mxu0 0.0
    %474 = vmatprep.subr.mxu0 0.0
    %475 = vmatpush1.xpose.msra.mxu0 0.0
    %476 = vmatprep.subr.mxu0 0.0
    %477 = vmatpush1.xpose.msra.mxu0 0.0
    %478 = vmatprep.subr.mxu0 0.0
    %479 = vmatpush1.xpose.msra.mxu0 0.0
    %480 = vmatprep.subr.mxu0 0.0
    %481 = vmatpush1.xpose.msra.mxu0 0.0
    %482 = vmatprep.subr.mxu0 0.0
    %483 = vmatpush1.xpose.msra.mxu0 0.0
    %484 = vmatprep.subr.mxu0 0.0
    %485 = vmatpush1.xpose.msra.mxu0 0.0
    %486 = vmatprep.subr.mxu0 0.0
    %487 = vmatpush1.xpose.msra.mxu0 0.0
    %488 = vmatprep.subr.mxu0 0.0
    %489 = vmatpush1.xpose.msra.mxu0 0.0
    %490 = vmatprep.subr.mxu0 0.0
    %491 = vmatpush1.xpose.msra.mxu0 %v460
    %492 = vmatprep.subr.mxu0 0.0
    %493 = vmatpush1.xpose.msra.mxu0 %v458
    %494 = vmatprep.subr.mxu0 0.0
    %495 = vmatpush2.xpose.msra.mxu0 0.0
    %496 = vmatprep.subr.mxu0 0.0
    %497 = vmatpush2.xpose.msra.mxu0 0.0
    %498 = vmatprep.subr.mxu0 0.0
    %499 = vmatpush2.xpose.msra.mxu0 0.0
    %500 = vmatprep.subr.mxu0 0.0
    %501 = vmatpush2.xpose.msra.mxu0 0.0
    %502 = vmatprep.subr.mxu0 0.0
    %503 = vmatpush2.xpose.msra.mxu0 0.0
    %504 = vmatprep.subr.mxu0 0.0
    %505 = vmatpush2.xpose.msra.mxu0 0.0
    %506 = vmatprep.subr.mxu0 0.0
    %507 = vmatpush2.xpose.msra.mxu0 0.0
    %508 = vmatprep.subr.mxu0 0.0
    %509 = vmatpush2.xpose.msra.mxu0 0.0
    %510 = vmatprep.subr.mxu0 0.0
    %511 = vmatpush2.xpose.msra.mxu0 0.0
    %512 = vmatprep.subr.mxu0 0.0
    %513 = vmatpush2.xpose.msra.mxu0 0.0
    %514 = vmatprep.subr.mxu0 0.0
    %515 = vmatpush2.xpose.msra.mxu0 0.0
    %516 = vmatprep.subr.mxu0 0.0
    %517 = vmatpush2.xpose.msra.mxu0 0.0
    %518 = vmatprep.subr.mxu0 0.0
    %519 = vmatpush2.xpose.msra.mxu0 0.0
    %520 = vmatprep.subr.mxu0 0.0
    %521 = vmatpush2.xpose.msra.mxu0 0.0
    %522 = vmatprep.subr.mxu0 0.0
    %523 = vmatpush2.xpose.msra.mxu0 0.0
    %524 = vmatprep.subr.mxu0 0.0
    %525 = vmatpush2.xpose.msra.mxu0 0.0
    %526 = vmatprep.mubr.f32.mxu0 0.0
    %527 = vmatmul.mubr.f32.gmra.mxu0 %v456
    %v528 = vpop.f32.mrf.mxu0
    %v529 = vadd.f32 0.0, %v528
    %v530 = vpop.f32.mrf.mxu0
    %531 = vdwg.mxu0
    %532 = vrot.lane.b32.xlu0 %v287, 120
    %v533 = vpop.permute.xlu0 %532
    %534 = vrot.lane.b32.xlu0 %v278, 120
    %v535 = vpop.permute.xlu0 %534
    %536 = vrot.lane.b32.xlu0 %v283, 120
    %v537 = vpop.permute.xlu0 %536
    %v538 = vsel %vm288, %v533, 0
    %v540 = vsel %vm288, %v535, 0
    %v542 = vsel %vm288, %v537, 0
    %544 = vmatprep.subr.mxu0 0.0
    %545 = vmatpush1.xpose.msra.mxu0 0.0
    %546 = vmatprep.subr.mxu0 0.0
    %547 = vmatpush1.xpose.msra.mxu0 0.0
    %548 = vmatprep.subr.mxu0 0.0
    %549 = vmatpush1.xpose.msra.mxu0 0.0
    %550 = vmatprep.subr.mxu0 0.0
    %551 = vmatpush1.xpose.msra.mxu0 0.0
    %552 = vmatprep.subr.mxu0 0.0
    %553 = vmatpush1.xpose.msra.mxu0 0.0
    %554 = vmatprep.subr.mxu0 0.0
    %555 = vmatpush1.xpose.msra.mxu0 0.0
    %556 = vmatprep.subr.mxu0 0.0
    %557 = vmatpush1.xpose.msra.mxu0 0.0
    %558 = vmatprep.subr.mxu0 0.0
    %559 = vmatpush1.xpose.msra.mxu0 0.0
    %560 = vmatprep.subr.mxu0 0.0
    %561 = vmatpush1.xpose.msra.mxu0 0.0
    %562 = vmatprep.subr.mxu0 0.0
    %563 = vmatpush1.xpose.msra.mxu0 0.0
    %564 = vmatprep.subr.mxu0 0.0
    %565 = vmatpush1.xpose.msra.mxu0 0.0
    %566 = vmatprep.subr.mxu0 0.0
    %567 = vmatpush1.xpose.msra.mxu0 0.0
    %568 = vmatprep.subr.mxu0 0.0
    %569 = vmatpush1.xpose.msra.mxu0 0.0
    %570 = vmatprep.subr.mxu0 0.0
    %571 = vmatpush1.xpose.msra.mxu0 0.0
    %572 = vmatprep.subr.mxu0 0.0
    %573 = vmatpush1.xpose.msra.mxu0 %v542
    %574 = vmatprep.subr.mxu0 0.0
    %575 = vmatpush1.xpose.msra.mxu0 %v540
    %576 = vmatprep.subr.mxu0 0.0
    %577 = vmatpush2.xpose.msra.mxu0 0.0
    %578 = vmatprep.subr.mxu0 0.0
    %579 = vmatpush2.xpose.msra.mxu0 0.0
    %580 = vmatprep.subr.mxu0 0.0
    %581 = vmatpush2.xpose.msra.mxu0 0.0
    %582 = vmatprep.subr.mxu0 0.0
    %583 = vmatpush2.xpose.msra.mxu0 0.0
    %584 = vmatprep.subr.mxu0 0.0
    %585 = vmatpush2.xpose.msra.mxu0 0.0
    %586 = vmatprep.subr.mxu0 0.0
    %587 = vmatpush2.xpose.msra.mxu0 0.0
    %588 = vmatprep.subr.mxu0 0.0
    %589 = vmatpush2.xpose.msra.mxu0 0.0
    %590 = vmatprep.subr.mxu0 0.0
    %591 = vmatpush2.xpose.msra.mxu0 0.0
    %592 = vmatprep.subr.mxu0 0.0
    %593 = vmatpush2.xpose.msra.mxu0 0.0
    %594 = vmatprep.subr.mxu0 0.0
    %595 = vmatpush2.xpose.msra.mxu0 0.0
    %596 = vmatprep.subr.mxu0 0.0
    %597 = vmatpush2.xpose.msra.mxu0 0.0
    %598 = vmatprep.subr.mxu0 0.0
    %599 = vmatpush2.xpose.msra.mxu0 0.0
    %600 = vmatprep.subr.mxu0 0.0
    %601 = vmatpush2.xpose.msra.mxu0 0.0
    %602 = vmatprep.subr.mxu0 0.0
    %603 = vmatpush2.xpose.msra.mxu0 0.0
    %604 = vmatprep.subr.mxu0 0.0
    %605 = vmatpush2.xpose.msra.mxu0 0.0
    %606 = vmatprep.subr.mxu0 0.0
    %607 = vmatpush2.xpose.msra.mxu0 0.0
    %608 = vmatprep.mubr.f32.mxu0 0.0
    %609 = vmatmul.mubr.f32.gmra.mxu0 %v538
    %v610 = vpop.f32.mrf.mxu0
    %v611 = vadd.f32 0.0, %v610
    %v612 = vpop.f32.mrf.mxu0
    %613 = vdwg.mxu0
    %s614 = scalar_lea.vmem [#allocation10], 8
    %615 = vst.msk [vmem:[%s614] sm:$0xff] %vm447, %v529
    %616 = vst.msk [vmem:[%s614 + $0x20] sm:$0xff] %vm447, %v611
    %617 = vrot.lane.b32.xlu0 %v286, 112
    %v618 = vpop.permute.xlu0 %617
    %619 = vrot.lane.b32.xlu0 %v268, 112
    %v620 = vpop.permute.xlu0 %619
    %621 = vrot.lane.b32.xlu0 %v273, 112
    %v622 = vpop.permute.xlu0 %621
    %v623 = vsel %vm288, %v618, 0
    %v625 = vsel %vm288, %v620, 0
    %v627 = vsel %vm288, %v622, 0
    %629 = vmatprep.subr.mxu0 0.0
    %630 = vmatpush1.xpose.msra.mxu0 0.0
    %631 = vmatprep.subr.mxu0 0.0
    %632 = vmatpush1.xpose.msra.mxu0 0.0
    %633 = vmatprep.subr.mxu0 0.0
    %634 = vmatpush1.xpose.msra.mxu0 0.0
    %635 = vmatprep.subr.mxu0 0.0
    %636 = vmatpush1.xpose.msra.mxu0 0.0
    %637 = vmatprep.subr.mxu0 0.0
    %638 = vmatpush1.xpose.msra.mxu0 0.0
    %639 = vmatprep.subr.mxu0 0.0
    %640 = vmatpush1.xpose.msra.mxu0 0.0
    %641 = vmatprep.subr.mxu0 0.0
    %642 = vmatpush1.xpose.msra.mxu0 0.0
    %643 = vmatprep.subr.mxu0 0.0
    %644 = vmatpush1.xpose.msra.mxu0 0.0
    %645 = vmatprep.subr.mxu0 0.0
    %646 = vmatpush1.xpose.msra.mxu0 0.0
    %647 = vmatprep.subr.mxu0 0.0
    %648 = vmatpush1.xpose.msra.mxu0 0.0
    %649 = vmatprep.subr.mxu0 0.0
    %650 = vmatpush1.xpose.msra.mxu0 0.0
    %651 = vmatprep.subr.mxu0 0.0
    %652 = vmatpush1.xpose.msra.mxu0 0.0
    %653 = vmatprep.subr.mxu0 0.0
    %654 = vmatpush1.xpose.msra.mxu0 0.0
    %655 = vmatprep.subr.mxu0 0.0
    %656 = vmatpush1.xpose.msra.mxu0 0.0
    %657 = vmatprep.subr.mxu0 0.0
    %658 = vmatpush1.xpose.msra.mxu0 %v627
    %659 = vmatprep.subr.mxu0 0.0
    %660 = vmatpush1.xpose.msra.mxu0 %v625
    %661 = vmatprep.subr.mxu0 0.0
    %662 = vmatpush2.xpose.msra.mxu0 0.0
    %663 = vmatprep.subr.mxu0 0.0
    %664 = vmatpush2.xpose.msra.mxu0 0.0
    %665 = vmatprep.subr.mxu0 0.0
    %666 = vmatpush2.xpose.msra.mxu0 0.0
    %667 = vmatprep.subr.mxu0 0.0
    %668 = vmatpush2.xpose.msra.mxu0 0.0
    %669 = vmatprep.subr.mxu0 0.0
    %670 = vmatpush2.xpose.msra.mxu0 0.0
    %671 = vmatprep.subr.mxu0 0.0
    %672 = vmatpush2.xpose.msra.mxu0 0.0
    %673 = vmatprep.subr.mxu0 0.0
    %674 = vmatpush2.xpose.msra.mxu0 0.0
    %675 = vmatprep.subr.mxu0 0.0
    %676 = vmatpush2.xpose.msra.mxu0 0.0
    %677 = vmatprep.subr.mxu0 0.0
    %678 = vmatpush2.xpose.msra.mxu0 0.0
    %679 = vmatprep.subr.mxu0 0.0
    %680 = vmatpush2.xpose.msra.mxu0 0.0
    %681 = vmatprep.subr.mxu0 0.0
    %682 = vmatpush2.xpose.msra.mxu0 0.0
    %683 = vmatprep.subr.mxu0 0.0
    %684 = vmatpush2.xpose.msra.mxu0 0.0
    %685 = vmatprep.subr.mxu0 0.0
    %686 = vmatpush2.xpose.msra.mxu0 0.0
    %687 = vmatprep.subr.mxu0 0.0
    %688 = vmatpush2.xpose.msra.mxu0 0.0
    %689 = vmatprep.subr.mxu0 0.0
    %690 = vmatpush2.xpose.msra.mxu0 0.0
    %691 = vmatprep.subr.mxu0 0.0
    %692 = vmatpush2.xpose.msra.mxu0 0.0
    %693 = vmatprep.mubr.f32.mxu0 0.0
    %694 = vmatmul.mubr.f32.gmra.mxu0 %v623
    %v695 = vpop.f32.mrf.mxu0
    %v696 = vadd.f32 0.0, %v695
    %v697 = vpop.f32.mrf.mxu0
    %698 = vdwg.mxu0
    %699 = vrot.lane.b32.xlu0 %v287, 112
    %v700 = vpop.permute.xlu0 %699
    %701 = vrot.lane.b32.xlu0 %v278, 112
    %v702 = vpop.permute.xlu0 %701
    %703 = vrot.lane.b32.xlu0 %v283, 112
    %v704 = vpop.permute.xlu0 %703
    %v705 = vsel %vm288, %v700, 0
    %v707 = vsel %vm288, %v702, 0
    %v709 = vsel %vm288, %v704, 0
    %711 = vmatprep.subr.mxu0 0.0
    %712 = vmatpush1.xpose.msra.mxu0 0.0
    %713 = vmatprep.subr.mxu0 0.0
    %714 = vmatpush1.xpose.msra.mxu0 0.0
    %715 = vmatprep.subr.mxu0 0.0
    %716 = vmatpush1.xpose.msra.mxu0 0.0
    %717 = vmatprep.subr.mxu0 0.0
    %718 = vmatpush1.xpose.msra.mxu0 0.0
    %719 = vmatprep.subr.mxu0 0.0
    %720 = vmatpush1.xpose.msra.mxu0 0.0
    %721 = vmatprep.subr.mxu0 0.0
    %722 = vmatpush1.xpose.msra.mxu0 0.0
    %723 = vmatprep.subr.mxu0 0.0
    %724 = vmatpush1.xpose.msra.mxu0 0.0
    %725 = vmatprep.subr.mxu0 0.0
    %726 = vmatpush1.xpose.msra.mxu0 0.0
    %727 = vmatprep.subr.mxu0 0.0
    %728 = vmatpush1.xpose.msra.mxu0 0.0
    %729 = vmatprep.subr.mxu0 0.0
    %730 = vmatpush1.xpose.msra.mxu0 0.0
    %731 = vmatprep.subr.mxu0 0.0
    %732 = vmatpush1.xpose.msra.mxu0 0.0
    %733 = vmatprep.subr.mxu0 0.0
    %734 = vmatpush1.xpose.msra.mxu0 0.0
    %735 = vmatprep.subr.mxu0 0.0
    %736 = vmatpush1.xpose.msra.mxu0 0.0
    %737 = vmatprep.subr.mxu0 0.0
    %738 = vmatpush1.xpose.msra.mxu0 0.0
    %739 = vmatprep.subr.mxu0 0.0
    %740 = vmatpush1.xpose.msra.mxu0 %v709
    %741 = vmatprep.subr.mxu0 0.0
    %742 = vmatpush1.xpose.msra.mxu0 %v707
    %743 = vmatprep.subr.mxu0 0.0
    %744 = vmatpush2.xpose.msra.mxu0 0.0
    %745 = vmatprep.subr.mxu0 0.0
    %746 = vmatpush2.xpose.msra.mxu0 0.0
    %747 = vmatprep.subr.mxu0 0.0
    %748 = vmatpush2.xpose.msra.mxu0 0.0
    %749 = vmatprep.subr.mxu0 0.0
    %750 = vmatpush2.xpose.msra.mxu0 0.0
    %751 = vmatprep.subr.mxu0 0.0
    %752 = vmatpush2.xpose.msra.mxu0 0.0
    %753 = vmatprep.subr.mxu0 0.0
    %754 = vmatpush2.xpose.msra.mxu0 0.0
    %755 = vmatprep.subr.mxu0 0.0
    %756 = vmatpush2.xpose.msra.mxu0 0.0
    %757 = vmatprep.subr.mxu0 0.0
    %758 = vmatpush2.xpose.msra.mxu0 0.0
    %759 = vmatprep.subr.mxu0 0.0
    %760 = vmatpush2.xpose.msra.mxu0 0.0
    %761 = vmatprep.subr.mxu0 0.0
    %762 = vmatpush2.xpose.msra.mxu0 0.0
    %763 = vmatprep.subr.mxu0 0.0
    %764 = vmatpush2.xpose.msra.mxu0 0.0
    %765 = vmatprep.subr.mxu0 0.0
    %766 = vmatpush2.xpose.msra.mxu0 0.0
    %767 = vmatprep.subr.mxu0 0.0
    %768 = vmatpush2.xpose.msra.mxu0 0.0
    %769 = vmatprep.subr.mxu0 0.0
    %770 = vmatpush2.xpose.msra.mxu0 0.0
    %771 = vmatprep.subr.mxu0 0.0
    %772 = vmatpush2.xpose.msra.mxu0 0.0
    %773 = vmatprep.subr.mxu0 0.0
    %774 = vmatpush2.xpose.msra.mxu0 0.0
    %775 = vmatprep.mubr.f32.mxu0 0.0
    %776 = vmatmul.mubr.f32.gmra.mxu0 %v705
    %v777 = vpop.f32.mrf.mxu0
    %v778 = vadd.f32 0.0, %v777
    %v779 = vpop.f32.mrf.mxu0
    %780 = vdwg.mxu0
    %s781 = scalar_lea.vmem [#allocation10], 16
    %782 = vst.msk [vmem:[%s781] sm:$0xff] %vm447, %v696
    %783 = vst.msk [vmem:[%s781 + $0x20] sm:$0xff] %vm447, %v778
    %784 = vrot.lane.b32.xlu0 %v286, 104
    %v785 = vpop.permute.xlu0 %784
    %786 = vrot.lane.b32.xlu0 %v268, 104
    %v787 = vpop.permute.xlu0 %786
    %788 = vrot.lane.b32.xlu0 %v273, 104
    %v789 = vpop.permute.xlu0 %788
    %v790 = vsel %vm288, %v785, 0
    %v792 = vsel %vm288, %v787, 0
    %v794 = vsel %vm288, %v789, 0
    %796 = vmatprep.subr.mxu0 0.0
    %797 = vmatpush1.xpose.msra.mxu0 0.0
    %798 = vmatprep.subr.mxu0 0.0
    %799 = vmatpush1.xpose.msra.mxu0 0.0
    %800 = vmatprep.subr.mxu0 0.0
    %801 = vmatpush1.xpose.msra.mxu0 0.0
    %802 = vmatprep.subr.mxu0 0.0
    %803 = vmatpush1.xpose.msra.mxu0 0.0
    %804 = vmatprep.subr.mxu0 0.0
    %805 = vmatpush1.xpose.msra.mxu0 0.0
    %806 = vmatprep.subr.mxu0 0.0
    %807 = vmatpush1.xpose.msra.mxu0 0.0
    %808 = vmatprep.subr.mxu0 0.0
    %809 = vmatpush1.xpose.msra.mxu0 0.0
    %810 = vmatprep.subr.mxu0 0.0
    %811 = vmatpush1.xpose.msra.mxu0 0.0
    %812 = vmatprep.subr.mxu0 0.0
    %813 = vmatpush1.xpose.msra.mxu0 0.0
    %814 = vmatprep.subr.mxu0 0.0
    %815 = vmatpush1.xpose.msra.mxu0 0.0
    %816 = vmatprep.subr.mxu0 0.0
    %817 = vmatpush1.xpose.msra.mxu0 0.0
    %818 = vmatprep.subr.mxu0 0.0
    %819 = vmatpush1.xpose.msra.mxu0 0.0
    %820 = vmatprep.subr.mxu0 0.0
    %821 = vmatpush1.xpose.msra.mxu0 0.0
    %822 = vmatprep.subr.mxu0 0.0
    %823 = vmatpush1.xpose.msra.mxu0 0.0
    %824 = vmatprep.subr.mxu0 0.0
    %825 = vmatpush1.xpose.msra.mxu0 %v794
    %826 = vmatprep.subr.mxu0 0.0
    %827 = vmatpush1.xpose.msra.mxu0 %v792
    %828 = vmatprep.subr.mxu0 0.0
    %829 = vmatpush2.xpose.msra.mxu0 0.0
    %830 = vmatprep.subr.mxu0 0.0
    %831 = vmatpush2.xpose.msra.mxu0 0.0
    %832 = vmatprep.subr.mxu0 0.0
    %833 = vmatpush2.xpose.msra.mxu0 0.0
    %834 = vmatprep.subr.mxu0 0.0
    %835 = vmatpush2.xpose.msra.mxu0 0.0
    %836 = vmatprep.subr.mxu0 0.0
    %837 = vmatpush2.xpose.msra.mxu0 0.0
    %838 = vmatprep.subr.mxu0 0.0
    %839 = vmatpush2.xpose.msra.mxu0 0.0
    %840 = vmatprep.subr.mxu0 0.0
    %841 = vmatpush2.xpose.msra.mxu0 0.0
    %842 = vmatprep.subr.mxu0 0.0
    %843 = vmatpush2.xpose.msra.mxu0 0.0
    %844 = vmatprep.subr.mxu0 0.0
    %845 = vmatpush2.xpose.msra.mxu0 0.0
    %846 = vmatprep.subr.mxu0 0.0
    %847 = vmatpush2.xpose.msra.mxu0 0.0
    %848 = vmatprep.subr.mxu0 0.0
    %849 = vmatpush2.xpose.msra.mxu0 0.0
    %850 = vmatprep.subr.mxu0 0.0
    %851 = vmatpush2.xpose.msra.mxu0 0.0
    %852 = vmatprep.subr.mxu0 0.0
    %853 = vmatpush2.xpose.msra.mxu0 0.0
    %854 = vmatprep.subr.mxu0 0.0
    %855 = vmatpush2.xpose.msra.mxu0 0.0
    %856 = vmatprep.subr.mxu0 0.0
    %857 = vmatpush2.xpose.msra.mxu0 0.0
    %858 = vmatprep.subr.mxu0 0.0
    %859 = vmatpush2.xpose.msra.mxu0 0.0
    %860 = vmatprep.mubr.f32.mxu0 0.0
    %861 = vmatmul.mubr.f32.gmra.mxu0 %v790
    %v862 = vpop.f32.mrf.mxu0
    %v863 = vadd.f32 0.0, %v862
    %v864 = vpop.f32.mrf.mxu0
    %865 = vdwg.mxu0
    %866 = vrot.lane.b32.xlu0 %v287, 104
    %v867 = vpop.permute.xlu0 %866
    %868 = vrot.lane.b32.xlu0 %v278, 104
    %v869 = vpop.permute.xlu0 %868
    %870 = vrot.lane.b32.xlu0 %v283, 104
    %v871 = vpop.permute.xlu0 %870
    %v872 = vsel %vm288, %v867, 0
    %v874 = vsel %vm288, %v869, 0
    %v876 = vsel %vm288, %v871, 0
    %878 = vmatprep.subr.mxu0 0.0
    %879 = vmatpush1.xpose.msra.mxu0 0.0
    %880 = vmatprep.subr.mxu0 0.0
    %881 = vmatpush1.xpose.msra.mxu0 0.0
    %882 = vmatprep.subr.mxu0 0.0
    %883 = vmatpush1.xpose.msra.mxu0 0.0
    %884 = vmatprep.subr.mxu0 0.0
    %885 = vmatpush1.xpose.msra.mxu0 0.0
    %886 = vmatprep.subr.mxu0 0.0
    %887 = vmatpush1.xpose.msra.mxu0 0.0
    %888 = vmatprep.subr.mxu0 0.0
    %889 = vmatpush1.xpose.msra.mxu0 0.0
    %890 = vmatprep.subr.mxu0 0.0
    %891 = vmatpush1.xpose.msra.mxu0 0.0
    %892 = vmatprep.subr.mxu0 0.0
    %893 = vmatpush1.xpose.msra.mxu0 0.0
    %894 = vmatprep.subr.mxu0 0.0
    %895 = vmatpush1.xpose.msra.mxu0 0.0
    %896 = vmatprep.subr.mxu0 0.0
    %897 = vmatpush1.xpose.msra.mxu0 0.0
    %898 = vmatprep.subr.mxu0 0.0
    %899 = vmatpush1.xpose.msra.mxu0 0.0
    %900 = vmatprep.subr.mxu0 0.0
    %901 = vmatpush1.xpose.msra.mxu0 0.0
    %902 = vmatprep.subr.mxu0 0.0
    %903 = vmatpush1.xpose.msra.mxu0 0.0
    %904 = vmatprep.subr.mxu0 0.0
    %905 = vmatpush1.xpose.msra.mxu0 0.0
    %906 = vmatprep.subr.mxu0 0.0
    %907 = vmatpush1.xpose.msra.mxu0 %v876
    %908 = vmatprep.subr.mxu0 0.0
    %909 = vmatpush1.xpose.msra.mxu0 %v874
    %910 = vmatprep.subr.mxu0 0.0
    %911 = vmatpush2.xpose.msra.mxu0 0.0
    %912 = vmatprep.subr.mxu0 0.0
    %913 = vmatpush2.xpose.msra.mxu0 0.0
    %914 = vmatprep.subr.mxu0 0.0
    %915 = vmatpush2.xpose.msra.mxu0 0.0
    %916 = vmatprep.subr.mxu0 0.0
    %917 = vmatpush2.xpose.msra.mxu0 0.0
    %918 = vmatprep.subr.mxu0 0.0
    %919 = vmatpush2.xpose.msra.mxu0 0.0
    %920 = vmatprep.subr.mxu0 0.0
    %921 = vmatpush2.xpose.msra.mxu0 0.0
    %922 = vmatprep.subr.mxu0 0.0
    %923 = vmatpush2.xpose.msra.mxu0 0.0
    %924 = vmatprep.subr.mxu0 0.0
    %925 = vmatpush2.xpose.msra.mxu0 0.0
    %926 = vmatprep.subr.mxu0 0.0
    %927 = vmatpush2.xpose.msra.mxu0 0.0
    %928 = vmatprep.subr.mxu0 0.0
    %929 = vmatpush2.xpose.msra.mxu0 0.0
    %930 = vmatprep.subr.mxu0 0.0
    %931 = vmatpush2.xpose.msra.mxu0 0.0
    %932 = vmatprep.subr.mxu0 0.0
    %933 = vmatpush2.xpose.msra.mxu0 0.0
    %934 = vmatprep.subr.mxu0 0.0
    %935 = vmatpush2.xpose.msra.mxu0 0.0
    %936 = vmatprep.subr.mxu0 0.0
    %937 = vmatpush2.xpose.msra.mxu0 0.0
    %938 = vmatprep.subr.mxu0 0.0
    %939 = vmatpush2.xpose.msra.mxu0 0.0
    %940 = vmatprep.subr.mxu0 0.0
    %941 = vmatpush2.xpose.msra.mxu0 0.0
    %942 = vmatprep.mubr.f32.mxu0 0.0
    %943 = vmatmul.mubr.f32.gmra.mxu0 %v872
    %v944 = vpop.f32.mrf.mxu0
    %v945 = vadd.f32 0.0, %v944
    %v946 = vpop.f32.mrf.mxu0
    %947 = vdwg.mxu0
    %s948 = scalar_lea.vmem [#allocation10], 24
    %949 = vst.msk [vmem:[%s948] sm:$0xff] %vm447, %v863
    %950 = vst.msk [vmem:[%s948 + $0x20] sm:$0xff] %vm447, %v945
    // Predicated region
    $region42: #{tpu_custom_call.1} parent=1 // pred_check
      _
    $region43: #{tpu_custom_call.1} parent=1 // pred_check_branch
      %952 = sbr.rel (0) target = $region45
    $region44: #{tpu_custom_call.1} parent=1 // pred_region
      %s954 = ssub.s32 1024, 1024
      %955 = vsyncadd [#allocation4], %s954
      %s956 = sshll.u32 [#allocation10], 4
      %s957 = int_to_ptr.vmem [resolvable:$true] %s956
      %962 = dma.vmem_to_hbm [thread:$0]  %s957, 1024, %s6, [#allocation4], 128, 128, 8
    $region45: #{tpu_custom_call.1} parent=1 // pred_fallthru
      _
    // Predicated region
    $region46: #{tpu_custom_call.1} parent=1 // pred_check
      _
    $region47: #{tpu_custom_call.1} parent=1 // pred_check_branch
      %964 = sbr.rel (0) target = $region49
    $region48: #{tpu_custom_call.1} parent=1 // pred_region
      %965 = dma.done [#allocation4], 1024
    $region49: #{tpu_custom_call.1} parent=1 // pred_fallthru
      _
    %966 = vsyncpa [#allocation3], 1
    %967 = vsyncpa [#allocation6], 1
    %968 = vsyncpa [#allocation9], 1
    %969 = vsyncpa [#allocation4], 1

</llo_original>
